<compile_context>
chip_gen: v6e
topology: v6e:2x2x1
jax: 0.10.0
libtpu: 0.0.40
codegen_flags: <defaults>
</compile_context>

<pallas_src>
import functools

import jax
import jax.numpy as jnp
from jax import lax
from jax.experimental import pallas as pl
from jax.experimental.pallas import tpu as pltpu  # noqa: F401  (TPU backend assumed)

SINKHORN_ITERS = 10  # TODO(synk): SinkhornKnopp iteration count / eps not given; using 10 iters, eps=1e-8.
NEG_INF = -9e15
DTYPE = jnp.float32


def _elu(v):
    # Safe ELU: exp only sees non-positive values -> no inf in the untaken branch.
    return jnp.where(v > 0, v, jnp.exp(jnp.minimum(v, 0.0)) - 1.0)


def _pack_head_weights(w):
    """(H, Fin, Fout) -> (Fin, H*Fout) so that column block h equals w[h]."""
    h, fin, fout = w.shape
    return jnp.transpose(w, (1, 0, 2)).reshape(fin, h * fout)


def _pack_attention_vecs(a):
    """(H, Fh, 2) -> block-diagonal (H*Fh, 2H) so that
    (wh_all @ out)[:, 2h + c] == wh_head_h @ a[h, :, c]."""
    h, fh, _ = a.shape
    eye = jnp.eye(h, dtype=a.dtype)
    blocks = a[:, :, None, :] * eye[:, None, :, None]  # (H, Fh, H, 2)
    return blocks.reshape(h * fh, h * 2)


# --------------------------------------------------------------------------
# Single fused kernel: Sinkhorn + GAT layer 1 + GAT layer 2 (all heads).
# --------------------------------------------------------------------------
def _egnna_fused_kernel(x0_ref, adj_ref, w1_ref, a1_ref, w2_ref, a2_ref, out_ref,
                        *, alpha, nheads, nhid, layers, residual):
    f32 = jnp.float32
    bf16 = jnp.bfloat16
    H, Fh = nheads, nhid

    # ---- Sinkhorn-Knopp normalization, all heads vectorized (hides the serial
    #      reduction chain of a single head across independent heads). ----
    adj = adj_ref[...].astype(f32)  # (H, N, N)

    def sk_body(_, a):
        a = a * pl.reciprocal(jnp.sum(a, axis=2, keepdims=True) + 1e-8, approx=True)
        a = a * pl.reciprocal(jnp.sum(a, axis=1, keepdims=True) + 1e-8, approx=True)
        return a

    adj = lax.fori_loop(0, SINKHORN_ITERS, sk_body, adj)

    x0 = x0_ref[...].astype(f32)  # (N, Fin)

    def gat_layer(x_in, w_all, a_cat, masks):
        # x_in: (N, Fin_l); w_all: (Fin_l, H*Fh); a_cat: (H*Fh, 2H); masks: list of (N, N).
        wh_all = jnp.dot(x_in.astype(bf16), w_all.astype(bf16),
                         preferred_element_type=f32)              # (N, H*Fh)   MXU (all heads)
        z_all = jnp.dot(wh_all.astype(bf16), a_cat.astype(bf16),
                        preferred_element_type=f32)               # (N, 2H)     MXU (all heads)
        outs, attns = [], []
        for h in range(H):
            wh = wh_all[:, h * Fh:(h + 1) * Fh]                   # (N, Fh)
            e = z_all[:, 2 * h:2 * h + 1] + z_all[:, 2 * h + 1:2 * h + 2].T  # (N, N)
            e = jnp.maximum(e, alpha * e)                         # LeakyReLU(alpha)
            e = jnp.where(masks[h] > 0, e, NEG_INF)               # mask non-edges
            e = e - jnp.max(e, axis=1, keepdims=True)             # stable softmax (dim=1)
            p = jnp.exp(e)
            att = p * pl.reciprocal(jnp.sum(p, axis=1, keepdims=True), approx=True)
            attns.append(att)
            hp = jnp.dot(att.astype(bf16), wh.astype(bf16),
                         preferred_element_type=f32)              # (N, Fh)     MXU
            outs.append(_elu(hp))                                 # concat=True -> ELU inside layer
        return jnp.concatenate(outs, axis=1), attns               # (N, H*Fh)

    # ---- Layer 1 (uses the Sinkhorn-normalized adjacencies as masks) ----
    masks1 = [adj[h] for h in range(H)]
    x1, attn1 = gat_layer(x0, w1_ref[...].astype(f32), a1_ref[...].astype(f32), masks1)
    if residual:
        x1 = x1 + jnp.tile(x0, (1, H))          # x0.repeat(1, H) (requires Fin == Fh)
    x1 = _elu(x1)                               # self.act
    # self.dropout(p=0.2) -> identity in eval/inference mode.

    if layers > 1:
        # ---- Layer 2 (uses layer-1 attention maps as masks; its own attention
        #      maps are never materialized to HBM since the module discards them). ----
        x2, _ = gat_layer(x1, w2_ref[...].astype(f32), a2_ref[...].astype(f32), attn1)
        if residual:
            x2 = x1 + x2
        x2 = _elu(x2)                           # self.act
        out_ref[...] = x2.astype(out_ref.dtype)
    else:
        out_ref[...] = x1.astype(out_ref.dtype)


# --------------------------------------------------------------------------
# Forward wrapper: parameter packing (layout plumbing) + one pallas_call.
# --------------------------------------------------------------------------
def egnna_forward(params, x0, adj0, *, alpha=0.2, layers=2, residual=0):
    W1, a1, W2, a2 = params["W1"], params["a1"], params["W2"], params["a2"]
    H, _, Fh = W1.shape
    N = x0.shape[0]

    w1_all = _pack_head_weights(W1)    # (Fin, H*Fh)
    a1_cat = _pack_attention_vecs(a1)  # (H*Fh, 2H)
    w2_all = _pack_head_weights(W2)    # (H*Fh, H*Fh)
    a2_cat = _pack_attention_vecs(a2)  # (H*Fh, 2H)

    kernel = functools.partial(
        _egnna_fused_kernel,
        alpha=alpha, nheads=H, nhid=Fh, layers=layers, residual=residual)

    # No grid: every operand fits comfortably in VMEM at these sizes, so the whole
    # forward runs as a single kernel invocation (no per-step or launch overhead,
    # no HBM round-trips for adjacencies/attentions/intermediate features).
    return pl.pallas_call(
        kernel,
        out_shape=jax.ShapeDtypeStruct((N, H * Fh), DTYPE),
    )(x0, adj0, w1_all, a1_cat, w2_all, a2_cat)


# --------------------------------------------------------------------------
# Deterministic parameter / input construction and smoke test.
# --------------------------------------------------------------------------
def init_params(key, nin, nhid, nheads):
    k1, k2, k3, k4 = jax.random.split(key, 4)

    # Xavier-uniform-ish deterministic init (synthetic weights, not a checkpoint).
    def xavier(k, shape):
        fan_in, fan_out = shape[-2], shape[-1]
        lim = 1.414 * (6.0 / (fan_in + fan_out)) ** 0.5
        return jax.random.uniform(k, shape, DTYPE, -lim, lim)

    return {
        "W1": xavier(k1, (nheads, nin, nhid)),
        "a1": xavier(k2, (nheads, nhid, 2)),
        "W2": xavier(k3, (nheads, nhid * nheads, nhid)),
        "a2": xavier(k4, (nheads, nhid, 2)),
    }


if __name__ == "__main__":
    N, nin, nhid, nheads = 16, 16, 32, 2
    alpha = 0.2

    key = jax.random.PRNGKey(0)
    kx, ka, kp = jax.random.split(key, 3)

    x0 = jax.random.normal(kx, (N, nin), DTYPE)
    u = jax.random.uniform(ka, (nheads, N, N), DTYPE)
    # sparse-ish nonnegative adjacency; add self-loops so Sinkhorn is well-posed
    adj0 = jnp.where(u > 0.5, u, 0.0) + jnp.eye(N, dtype=DTYPE)[None, :, :]

    params = init_params(kp, nin, nhid, nheads)

    out = egnna_forward(params, x0, adj0, alpha=alpha, layers=2, residual=0)
    out = jax.block_until_ready(out)
    assert out.shape == (N, nheads * nhid)
    assert bool(jnp.all(jnp.isfinite(out)))
    print("KERNEL_OK")
</pallas_src>

<mosaic_0001>
module attributes {stable_mosaic.version = 11 : i64} {
  func.func @_egnna_fused_kernel(%arg0: memref<16x16xf32, #tpu.memory_space<vmem>>, %arg1: memref<2x16x16xf32, #tpu.memory_space<vmem>>, %arg2: memref<16x64xf32, #tpu.memory_space<vmem>>, %arg3: memref<64x4xf32, #tpu.memory_space<vmem>>, %arg4: memref<64x64xf32, #tpu.memory_space<vmem>>, %arg5: memref<64x4xf32, #tpu.memory_space<vmem>>, %arg6: memref<16x64xf32, #tpu.memory_space<vmem>>) attributes {dimension_semantics = [], scalar_prefetch = 0 : i64, scratch_operands = 0 : i64, tpu.core_type = #tpu.core_type<tc>} {
    %c0 = arith.constant 0 : index
    %c0_0 = arith.constant 0 : index
    %c0_1 = arith.constant 0 : index
    %0 = vector.load %arg1[%c0, %c0_0, %c0_1] : memref<2x16x16xf32, #tpu.memory_space<vmem>>, vector<2x16x16xf32>
    %c0_i32 = arith.constant 0 : i32
    %c10_i32 = arith.constant 10 : i32
    %1 = arith.addi %c0_i32, %c10_i32 : i32
    %c1_i32 = arith.constant 1 : i32
    %2 = scf.for %arg7 = %c0_i32 to %1 step %c1_i32 iter_args(%arg8 = %0) -> (vector<2x16x16xf32>)  : i32 {
      %cst_59 = arith.constant dense<0.000000e+00> : vector<2x16xf32>
      %183 = vector.multi_reduction <add>, %arg8, %cst_59 [2] : vector<2x16x16xf32> to vector<2x16xf32>
      %184 = vector.shape_cast %183 : vector<2x16xf32> to vector<2x16x1xf32>
      %cst_60 = arith.constant 9.99999993E-9 : f32
      %185 = vector.broadcast %cst_60 : f32 to vector<2x16x1xf32>
      %186 = arith.addf %184, %185 : vector<2x16x1xf32>
      %187 = tpu.reciprocal %186 {approx = true} : vector<2x16x1xf32> -> vector<2x16x1xf32>
      %188 = vector.broadcast %187 : vector<2x16x1xf32> to vector<2x16x16xf32>
      %189 = arith.mulf %arg8, %188 : vector<2x16x16xf32>
      %cst_61 = arith.constant dense<0.000000e+00> : vector<2x16xf32>
      %190 = vector.multi_reduction <add>, %189, %cst_61 [1] : vector<2x16x16xf32> to vector<2x16xf32>
      %191 = vector.shape_cast %190 : vector<2x16xf32> to vector<2x1x16xf32>
      %cst_62 = arith.constant 9.99999993E-9 : f32
      %192 = vector.broadcast %cst_62 : f32 to vector<2x1x16xf32>
      %193 = arith.addf %191, %192 : vector<2x1x16xf32>
      %194 = tpu.reciprocal %193 {approx = true} : vector<2x1x16xf32> -> vector<2x1x16xf32>
      %195 = vector.broadcast %194 : vector<2x1x16xf32> to vector<2x16x16xf32>
      %196 = arith.mulf %189, %195 : vector<2x16x16xf32>
      scf.yield %196 : vector<2x16x16xf32>
    }
    %c0_2 = arith.constant 0 : index
    %c0_3 = arith.constant 0 : index
    %3 = vector.load %arg0[%c0_2, %c0_3] : memref<16x16xf32, #tpu.memory_space<vmem>>, vector<16x16xf32>
    %4 = vector.extract_strided_slice %2 {offsets = [0, 0, 0], sizes = [1, 16, 16], strides = [1, 1, 1]} : vector<2x16x16xf32> to vector<1x16x16xf32>
    %5 = vector.shape_cast %4 : vector<1x16x16xf32> to vector<16x16xf32>
    %6 = vector.extract_strided_slice %2 {offsets = [1, 0, 0], sizes = [1, 16, 16], strides = [1, 1, 1]} : vector<2x16x16xf32> to vector<1x16x16xf32>
    %7 = vector.shape_cast %6 : vector<1x16x16xf32> to vector<16x16xf32>
    %c0_4 = arith.constant 0 : index
    %c0_5 = arith.constant 0 : index
    %8 = vector.load %arg2[%c0_4, %c0_5] : memref<16x64xf32, #tpu.memory_space<vmem>>, vector<16x64xf32>
    %c0_6 = arith.constant 0 : index
    %c0_7 = arith.constant 0 : index
    %9 = vector.load %arg3[%c0_6, %c0_7] : memref<64x4xf32, #tpu.memory_space<vmem>>, vector<64x4xf32>
    %10 = arith.truncf %3 : vector<16x16xf32> to vector<16x16xbf16>
    %11 = arith.truncf %8 : vector<16x64xf32> to vector<16x64xbf16>
    %cst = arith.constant dense<0.000000e+00> : vector<16x64xf32>
    %12 = tpu.matmul %10, %11, %cst {dimension_numbers = #tpu.dot_dimension_numbers<[1], [0], [0], [1], [0, 0, 1, 1], [], []>} : vector<16x16xbf16>, vector<16x64xbf16>, vector<16x64xf32> -> vector<16x64xf32>
    %13 = arith.truncf %12 : vector<16x64xf32> to vector<16x64xbf16>
    %14 = arith.truncf %9 : vector<64x4xf32> to vector<64x4xbf16>
    %cst_8 = arith.constant dense<0.000000e+00> : vector<16x4xf32>
    %15 = tpu.matmul %13, %14, %cst_8 {dimension_numbers = #tpu.dot_dimension_numbers<[1], [0], [0], [1], [0, 0, 1, 1], [], []>} : vector<16x64xbf16>, vector<64x4xbf16>, vector<16x4xf32> -> vector<16x4xf32>
    %16 = vector.extract_strided_slice %12 {offsets = [0, 0], sizes = [16, 32], strides = [1, 1]} : vector<16x64xf32> to vector<16x32xf32>
    %17 = vector.extract_strided_slice %15 {offsets = [0, 0], sizes = [16, 1], strides = [1, 1]} : vector<16x4xf32> to vector<16x1xf32>
    %18 = vector.extract_strided_slice %15 {offsets = [0, 1], sizes = [16, 1], strides = [1, 1]} : vector<16x4xf32> to vector<16x1xf32>
    %19 = tpu.transpose %18, [1, 0] : vector<16x1xf32> -> vector<1x16xf32>
    %20 = vector.broadcast %17 : vector<16x1xf32> to vector<16x16xf32>
    %21 = vector.broadcast %19 : vector<1x16xf32> to vector<16x16xf32>
    %22 = arith.addf %20, %21 : vector<16x16xf32>
    %cst_9 = arith.constant 2.000000e-01 : f32
    %23 = vector.broadcast %cst_9 : f32 to vector<16x16xf32>
    %24 = arith.mulf %23, %22 : vector<16x16xf32>
    %25 = arith.maximumf %22, %24 : vector<16x16xf32>
    %cst_10 = arith.constant 0.000000e+00 : f32
    %26 = vector.broadcast %cst_10 : f32 to vector<16x16xf32>
    %27 = arith.cmpf ogt, %5, %26 : vector<16x16xf32>
    %cst_11 = arith.constant -9.000000e+15 : f32
    %28 = vector.broadcast %cst_11 : f32 to vector<16x16xf32>
    %29 = arith.select %27, %25, %28 : vector<16x16xi1>, vector<16x16xf32>
    %cst_12 = arith.constant dense<0xFF800000> : vector<16xf32>
    %30 = vector.multi_reduction <maximumf>, %29, %cst_12 [1] : vector<16x16xf32> to vector<16xf32>
    %31 = vector.shape_cast %30 : vector<16xf32> to vector<16x1xf32>
    %32 = vector.broadcast %31 : vector<16x1xf32> to vector<16x16xf32>
    %33 = arith.subf %29, %32 : vector<16x16xf32>
    %34 = math.exp %33 : vector<16x16xf32>
    %cst_13 = arith.constant dense<0.000000e+00> : vector<16xf32>
    %35 = vector.multi_reduction <add>, %34, %cst_13 [1] : vector<16x16xf32> to vector<16xf32>
    %36 = vector.shape_cast %35 : vector<16xf32> to vector<16x1xf32>
    %37 = tpu.reciprocal %36 {approx = true} : vector<16x1xf32> -> vector<16x1xf32>
    %38 = vector.broadcast %37 : vector<16x1xf32> to vector<16x16xf32>
    %39 = arith.mulf %34, %38 : vector<16x16xf32>
    %40 = arith.truncf %39 : vector<16x16xf32> to vector<16x16xbf16>
    %41 = arith.truncf %16 : vector<16x32xf32> to vector<16x32xbf16>
    %cst_14 = arith.constant dense<0.000000e+00> : vector<16x32xf32>
    %42 = tpu.matmul %40, %41, %cst_14 {dimension_numbers = #tpu.dot_dimension_numbers<[1], [0], [0], [1], [0, 0, 1, 1], [], []>} : vector<16x16xbf16>, vector<16x32xbf16>, vector<16x32xf32> -> vector<16x32xf32>
    %cst_15 = arith.constant 0.000000e+00 : f32
    %43 = vector.broadcast %cst_15 : f32 to vector<16x32xf32>
    %44 = arith.cmpf ogt, %42, %43 : vector<16x32xf32>
    %cst_16 = arith.constant 0.000000e+00 : f32
    %45 = vector.broadcast %cst_16 : f32 to vector<16x32xf32>
    %46 = arith.minimumf %42, %45 : vector<16x32xf32>
    %47 = math.exp %46 : vector<16x32xf32>
    %cst_17 = arith.constant 1.000000e+00 : f32
    %48 = vector.broadcast %cst_17 : f32 to vector<16x32xf32>
    %49 = arith.subf %47, %48 : vector<16x32xf32>
    %50 = arith.select %44, %42, %49 : vector<16x32xi1>, vector<16x32xf32>
    %51 = vector.extract_strided_slice %12 {offsets = [0, 32], sizes = [16, 32], strides = [1, 1]} : vector<16x64xf32> to vector<16x32xf32>
    %52 = vector.extract_strided_slice %15 {offsets = [0, 2], sizes = [16, 1], strides = [1, 1]} : vector<16x4xf32> to vector<16x1xf32>
    %53 = vector.extract_strided_slice %15 {offsets = [0, 3], sizes = [16, 1], strides = [1, 1]} : vector<16x4xf32> to vector<16x1xf32>
    %54 = tpu.transpose %53, [1, 0] : vector<16x1xf32> -> vector<1x16xf32>
    %55 = vector.broadcast %52 : vector<16x1xf32> to vector<16x16xf32>
    %56 = vector.broadcast %54 : vector<1x16xf32> to vector<16x16xf32>
    %57 = arith.addf %55, %56 : vector<16x16xf32>
    %cst_18 = arith.constant 2.000000e-01 : f32
    %58 = vector.broadcast %cst_18 : f32 to vector<16x16xf32>
    %59 = arith.mulf %58, %57 : vector<16x16xf32>
    %60 = arith.maximumf %57, %59 : vector<16x16xf32>
    %cst_19 = arith.constant 0.000000e+00 : f32
    %61 = vector.broadcast %cst_19 : f32 to vector<16x16xf32>
    %62 = arith.cmpf ogt, %7, %61 : vector<16x16xf32>
    %cst_20 = arith.constant -9.000000e+15 : f32
    %63 = vector.broadcast %cst_20 : f32 to vector<16x16xf32>
    %64 = arith.select %62, %60, %63 : vector<16x16xi1>, vector<16x16xf32>
    %cst_21 = arith.constant dense<0xFF800000> : vector<16xf32>
    %65 = vector.multi_reduction <maximumf>, %64, %cst_21 [1] : vector<16x16xf32> to vector<16xf32>
    %66 = vector.shape_cast %65 : vector<16xf32> to vector<16x1xf32>
    %67 = vector.broadcast %66 : vector<16x1xf32> to vector<16x16xf32>
    %68 = arith.subf %64, %67 : vector<16x16xf32>
    %69 = math.exp %68 : vector<16x16xf32>
    %cst_22 = arith.constant dense<0.000000e+00> : vector<16xf32>
    %70 = vector.multi_reduction <add>, %69, %cst_22 [1] : vector<16x16xf32> to vector<16xf32>
    %71 = vector.shape_cast %70 : vector<16xf32> to vector<16x1xf32>
    %72 = tpu.reciprocal %71 {approx = true} : vector<16x1xf32> -> vector<16x1xf32>
    %73 = vector.broadcast %72 : vector<16x1xf32> to vector<16x16xf32>
    %74 = arith.mulf %69, %73 : vector<16x16xf32>
    %75 = arith.truncf %74 : vector<16x16xf32> to vector<16x16xbf16>
    %76 = arith.truncf %51 : vector<16x32xf32> to vector<16x32xbf16>
    %cst_23 = arith.constant dense<0.000000e+00> : vector<16x32xf32>
    %77 = tpu.matmul %75, %76, %cst_23 {dimension_numbers = #tpu.dot_dimension_numbers<[1], [0], [0], [1], [0, 0, 1, 1], [], []>} : vector<16x16xbf16>, vector<16x32xbf16>, vector<16x32xf32> -> vector<16x32xf32>
    %cst_24 = arith.constant 0.000000e+00 : f32
    %78 = vector.broadcast %cst_24 : f32 to vector<16x32xf32>
    %79 = arith.cmpf ogt, %77, %78 : vector<16x32xf32>
    %cst_25 = arith.constant 0.000000e+00 : f32
    %80 = vector.broadcast %cst_25 : f32 to vector<16x32xf32>
    %81 = arith.minimumf %77, %80 : vector<16x32xf32>
    %82 = math.exp %81 : vector<16x32xf32>
    %cst_26 = arith.constant 1.000000e+00 : f32
    %83 = vector.broadcast %cst_26 : f32 to vector<16x32xf32>
    %84 = arith.subf %82, %83 : vector<16x32xf32>
    %85 = arith.select %79, %77, %84 : vector<16x32xi1>, vector<16x32xf32>
    %86 = tpu.concatenate %50, %85 in 1 : vector<16x32xf32>, vector<16x32xf32> -> vector<16x64xf32>
    %cst_27 = arith.constant 0.000000e+00 : f32
    %87 = vector.broadcast %cst_27 : f32 to vector<16x64xf32>
    %88 = arith.cmpf ogt, %86, %87 : vector<16x64xf32>
    %cst_28 = arith.constant 0.000000e+00 : f32
    %89 = vector.broadcast %cst_28 : f32 to vector<16x64xf32>
    %90 = arith.minimumf %86, %89 : vector<16x64xf32>
    %91 = math.exp %90 : vector<16x64xf32>
    %cst_29 = arith.constant 1.000000e+00 : f32
    %92 = vector.broadcast %cst_29 : f32 to vector<16x64xf32>
    %93 = arith.subf %91, %92 : vector<16x64xf32>
    %94 = arith.select %88, %86, %93 : vector<16x64xi1>, vector<16x64xf32>
    %c0_30 = arith.constant 0 : index
    %c0_31 = arith.constant 0 : index
    %95 = vector.load %arg4[%c0_30, %c0_31] : memref<64x64xf32, #tpu.memory_space<vmem>>, vector<64x64xf32>
    %c0_32 = arith.constant 0 : index
    %c0_33 = arith.constant 0 : index
    %96 = vector.load %arg5[%c0_32, %c0_33] : memref<64x4xf32, #tpu.memory_space<vmem>>, vector<64x4xf32>
    %97 = arith.truncf %94 : vector<16x64xf32> to vector<16x64xbf16>
    %98 = arith.truncf %95 : vector<64x64xf32> to vector<64x64xbf16>
    %cst_34 = arith.constant dense<0.000000e+00> : vector<16x64xf32>
    %99 = tpu.matmul %97, %98, %cst_34 {dimension_numbers = #tpu.dot_dimension_numbers<[1], [0], [0], [1], [0, 0, 1, 1], [], []>} : vector<16x64xbf16>, vector<64x64xbf16>, vector<16x64xf32> -> vector<16x64xf32>
    %100 = arith.truncf %99 : vector<16x64xf32> to vector<16x64xbf16>
    %101 = arith.truncf %96 : vector<64x4xf32> to vector<64x4xbf16>
    %cst_35 = arith.constant dense<0.000000e+00> : vector<16x4xf32>
    %102 = tpu.matmul %100, %101, %cst_35 {dimension_numbers = #tpu.dot_dimension_numbers<[1], [0], [0], [1], [0, 0, 1, 1], [], []>} : vector<16x64xbf16>, vector<64x4xbf16>, vector<16x4xf32> -> vector<16x4xf32>
    %103 = vector.extract_strided_slice %99 {offsets = [0, 0], sizes = [16, 32], strides = [1, 1]} : vector<16x64xf32> to vector<16x32xf32>
    %104 = vector.extract_strided_slice %102 {offsets = [0, 0], sizes = [16, 1], strides = [1, 1]} : vector<16x4xf32> to vector<16x1xf32>
    %105 = vector.extract_strided_slice %102 {offsets = [0, 1], sizes = [16, 1], strides = [1, 1]} : vector<16x4xf32> to vector<16x1xf32>
    %106 = tpu.transpose %105, [1, 0] : vector<16x1xf32> -> vector<1x16xf32>
    %107 = vector.broadcast %104 : vector<16x1xf32> to vector<16x16xf32>
    %108 = vector.broadcast %106 : vector<1x16xf32> to vector<16x16xf32>
    %109 = arith.addf %107, %108 : vector<16x16xf32>
    %cst_36 = arith.constant 2.000000e-01 : f32
    %110 = vector.broadcast %cst_36 : f32 to vector<16x16xf32>
    %111 = arith.mulf %110, %109 : vector<16x16xf32>
    %112 = arith.maximumf %109, %111 : vector<16x16xf32>
    %cst_37 = arith.constant 0.000000e+00 : f32
    %113 = vector.broadcast %cst_37 : f32 to vector<16x16xf32>
    %114 = arith.cmpf ogt, %39, %113 : vector<16x16xf32>
    %cst_38 = arith.constant -9.000000e+15 : f32
    %115 = vector.broadcast %cst_38 : f32 to vector<16x16xf32>
    %116 = arith.select %114, %112, %115 : vector<16x16xi1>, vector<16x16xf32>
    %cst_39 = arith.constant dense<0xFF800000> : vector<16xf32>
    %117 = vector.multi_reduction <maximumf>, %116, %cst_39 [1] : vector<16x16xf32> to vector<16xf32>
    %118 = vector.shape_cast %117 : vector<16xf32> to vector<16x1xf32>
    %119 = vector.broadcast %118 : vector<16x1xf32> to vector<16x16xf32>
    %120 = arith.subf %116, %119 : vector<16x16xf32>
    %121 = math.exp %120 : vector<16x16xf32>
    %cst_40 = arith.constant dense<0.000000e+00> : vector<16xf32>
    %122 = vector.multi_reduction <add>, %121, %cst_40 [1] : vector<16x16xf32> to vector<16xf32>
    %123 = vector.shape_cast %122 : vector<16xf32> to vector<16x1xf32>
    %124 = tpu.reciprocal %123 {approx = true} : vector<16x1xf32> -> vector<16x1xf32>
    %125 = vector.broadcast %124 : vector<16x1xf32> to vector<16x16xf32>
    %126 = arith.mulf %121, %125 : vector<16x16xf32>
    %127 = arith.truncf %126 : vector<16x16xf32> to vector<16x16xbf16>
    %128 = arith.truncf %103 : vector<16x32xf32> to vector<16x32xbf16>
    %cst_41 = arith.constant dense<0.000000e+00> : vector<16x32xf32>
    %129 = tpu.matmul %127, %128, %cst_41 {dimension_numbers = #tpu.dot_dimension_numbers<[1], [0], [0], [1], [0, 0, 1, 1], [], []>} : vector<16x16xbf16>, vector<16x32xbf16>, vector<16x32xf32> -> vector<16x32xf32>
    %cst_42 = arith.constant 0.000000e+00 : f32
    %130 = vector.broadcast %cst_42 : f32 to vector<16x32xf32>
    %131 = arith.cmpf ogt, %129, %130 : vector<16x32xf32>
    %cst_43 = arith.constant 0.000000e+00 : f32
    %132 = vector.broadcast %cst_43 : f32 to vector<16x32xf32>
    %133 = arith.minimumf %129, %132 : vector<16x32xf32>
    %134 = math.exp %133 : vector<16x32xf32>
    %cst_44 = arith.constant 1.000000e+00 : f32
    %135 = vector.broadcast %cst_44 : f32 to vector<16x32xf32>
    %136 = arith.subf %134, %135 : vector<16x32xf32>
    %137 = arith.select %131, %129, %136 : vector<16x32xi1>, vector<16x32xf32>
    %138 = vector.extract_strided_slice %99 {offsets = [0, 32], sizes = [16, 32], strides = [1, 1]} : vector<16x64xf32> to vector<16x32xf32>
    %139 = vector.extract_strided_slice %102 {offsets = [0, 2], sizes = [16, 1], strides = [1, 1]} : vector<16x4xf32> to vector<16x1xf32>
    %140 = vector.extract_strided_slice %102 {offsets = [0, 3], sizes = [16, 1], strides = [1, 1]} : vector<16x4xf32> to vector<16x1xf32>
    %141 = tpu.transpose %140, [1, 0] : vector<16x1xf32> -> vector<1x16xf32>
    %142 = vector.broadcast %139 : vector<16x1xf32> to vector<16x16xf32>
    %143 = vector.broadcast %141 : vector<1x16xf32> to vector<16x16xf32>
    %144 = arith.addf %142, %143 : vector<16x16xf32>
    %cst_45 = arith.constant 2.000000e-01 : f32
    %145 = vector.broadcast %cst_45 : f32 to vector<16x16xf32>
    %146 = arith.mulf %145, %144 : vector<16x16xf32>
    %147 = arith.maximumf %144, %146 : vector<16x16xf32>
    %cst_46 = arith.constant 0.000000e+00 : f32
    %148 = vector.broadcast %cst_46 : f32 to vector<16x16xf32>
    %149 = arith.cmpf ogt, %74, %148 : vector<16x16xf32>
    %cst_47 = arith.constant -9.000000e+15 : f32
    %150 = vector.broadcast %cst_47 : f32 to vector<16x16xf32>
    %151 = arith.select %149, %147, %150 : vector<16x16xi1>, vector<16x16xf32>
    %cst_48 = arith.constant dense<0xFF800000> : vector<16xf32>
    %152 = vector.multi_reduction <maximumf>, %151, %cst_48 [1] : vector<16x16xf32> to vector<16xf32>
    %153 = vector.shape_cast %152 : vector<16xf32> to vector<16x1xf32>
    %154 = vector.broadcast %153 : vector<16x1xf32> to vector<16x16xf32>
    %155 = arith.subf %151, %154 : vector<16x16xf32>
    %156 = math.exp %155 : vector<16x16xf32>
    %cst_49 = arith.constant dense<0.000000e+00> : vector<16xf32>
    %157 = vector.multi_reduction <add>, %156, %cst_49 [1] : vector<16x16xf32> to vector<16xf32>
    %158 = vector.shape_cast %157 : vector<16xf32> to vector<16x1xf32>
    %159 = tpu.reciprocal %158 {approx = true} : vector<16x1xf32> -> vector<16x1xf32>
    %160 = vector.broadcast %159 : vector<16x1xf32> to vector<16x16xf32>
    %161 = arith.mulf %156, %160 : vector<16x16xf32>
    %162 = arith.truncf %161 : vector<16x16xf32> to vector<16x16xbf16>
    %163 = arith.truncf %138 : vector<16x32xf32> to vector<16x32xbf16>
    %cst_50 = arith.constant dense<0.000000e+00> : vector<16x32xf32>
    %164 = tpu.matmul %162, %163, %cst_50 {dimension_numbers = #tpu.dot_dimension_numbers<[1], [0], [0], [1], [0, 0, 1, 1], [], []>} : vector<16x16xbf16>, vector<16x32xbf16>, vector<16x32xf32> -> vector<16x32xf32>
    %cst_51 = arith.constant 0.000000e+00 : f32
    %165 = vector.broadcast %cst_51 : f32 to vector<16x32xf32>
    %166 = arith.cmpf ogt, %164, %165 : vector<16x32xf32>
    %cst_52 = arith.constant 0.000000e+00 : f32
    %167 = vector.broadcast %cst_52 : f32 to vector<16x32xf32>
    %168 = arith.minimumf %164, %167 : vector<16x32xf32>
    %169 = math.exp %168 : vector<16x32xf32>
    %cst_53 = arith.constant 1.000000e+00 : f32
    %170 = vector.broadcast %cst_53 : f32 to vector<16x32xf32>
    %171 = arith.subf %169, %170 : vector<16x32xf32>
    %172 = arith.select %166, %164, %171 : vector<16x32xi1>, vector<16x32xf32>
    %173 = tpu.concatenate %137, %172 in 1 : vector<16x32xf32>, vector<16x32xf32> -> vector<16x64xf32>
    %cst_54 = arith.constant 0.000000e+00 : f32
    %174 = vector.broadcast %cst_54 : f32 to vector<16x64xf32>
    %175 = arith.cmpf ogt, %173, %174 : vector<16x64xf32>
    %cst_55 = arith.constant 0.000000e+00 : f32
    %176 = vector.broadcast %cst_55 : f32 to vector<16x64xf32>
    %177 = arith.minimumf %173, %176 : vector<16x64xf32>
    %178 = math.exp %177 : vector<16x64xf32>
    %cst_56 = arith.constant 1.000000e+00 : f32
    %179 = vector.broadcast %cst_56 : f32 to vector<16x64xf32>
    %180 = arith.subf %178, %179 : vector<16x64xf32>
    %181 = arith.select %175, %173, %180 : vector<16x64xi1>, vector<16x64xf32>
    %c0_57 = arith.constant 0 : index
    %c0_58 = arith.constant 0 : index
    %182 = vector.load %arg6[%c0_57, %c0_58] : memref<16x64xf32, #tpu.memory_space<vmem>>, vector<16x64xf32>
    tpu.vector_store %arg6[%c0_57, %c0_58], %181 {strides = array<i32>} : memref<16x64xf32, #tpu.memory_space<vmem>>, vector<16x64xf32>,
    return
  }
}

</mosaic_0001>

<llo_original>
// kernel: tpu_custom_call.1
$region0: #{tpu_custom_call.1}
  #allocation0 [shape = 'u32[]', space=smem, size = 0x4, offset = 0x4, fixed_abs, tag = 'smem constant byte address 0x4 - core index']
  #allocation1 [shape = 'u32[144,128]{1,0:T(1,128)}', space=vmem, size = 0x12000, scoped, tag = 'internal scratch']
  %s0 = inlined_call_operand.vmem [shape: f32[16,16], index: 0, kind: input, shape index: {}]
  %s1 = inlined_call_operand.vmem [shape: f32[2,16,16], index: 1, kind: input, shape index: {}]
  %s2 = inlined_call_operand.vmem [shape: f32[16,64], index: 2, kind: input, shape index: {}]
  %s3 = inlined_call_operand.vmem [shape: f32[64,4], index: 3, kind: input, shape index: {}]
  %s4 = inlined_call_operand.vmem [shape: f32[64,64], index: 4, kind: input, shape index: {}]
  %s5 = inlined_call_operand.vmem [shape: f32[64,4], index: 5, kind: input, shape index: {}]
  %s6 = inlined_call_operand.hbm [shape: f32[16,64], index: 6, kind: output, shape index: {}]
  %s7 = sld [smem:[#allocation0]]
  $region41: #{tpu_custom_call.1} parent=0
    _
  %s9 = ssub.s32 1, %s7
  %s10 = scalar_select 0, %s9, %s7
  $region1: #{tpu_custom_call.1} parent=0
    #allocation2 [shape = 'u8[8192]{0}', space=vmem, size = 0x2000, scoped, tag = 'output window, operand 0, single buffered']
    #allocation3 [shape = 's32[1]{0}', space=sflag, size = 0x4, scoped, tag = 'scoped memory for tpu_custom_call.1']
    %11 = vsyncpa [#allocation3], 0
    // Predicated region
    $region2: #{tpu_custom_call.1} parent=1 // pred_check
      _
    $region3: #{tpu_custom_call.1} parent=1 // pred_check_branch
      %13 = sbr.rel (0) target = $region5
    $region4: #{tpu_custom_call.1} parent=1 // pred_region
      _
    $region5: #{tpu_custom_call.1} parent=1 // pred_fallthru
      _
    // Predicated region
    $region6: #{tpu_custom_call.1} parent=1 // pred_check
      _
    $region7: #{tpu_custom_call.1} parent=1 // pred_check_branch
      %15 = sbr.rel (0) target = $region9
    $region8: #{tpu_custom_call.1} parent=1 // pred_region
      _
    $region9: #{tpu_custom_call.1} parent=1 // pred_fallthru
      _
    // Predicated region
    $region10: #{tpu_custom_call.1} parent=1 // pred_check
      _
    $region11: #{tpu_custom_call.1} parent=1 // pred_check_branch
      %17 = sbr.rel (0) target = $region13
    $region12: #{tpu_custom_call.1} parent=1 // pred_region
      _
    $region13: #{tpu_custom_call.1} parent=1 // pred_fallthru
      _
    // Predicated region
    $region14: #{tpu_custom_call.1} parent=1 // pred_check
      _
    $region15: #{tpu_custom_call.1} parent=1 // pred_check_branch
      %19 = sbr.rel (0) target = $region17
    $region16: #{tpu_custom_call.1} parent=1 // pred_region
      _
    $region17: #{tpu_custom_call.1} parent=1 // pred_fallthru
      _
    // Predicated region
    $region18: #{tpu_custom_call.1} parent=1 // pred_check
      _
    $region19: #{tpu_custom_call.1} parent=1 // pred_check_branch
      %21 = sbr.rel (0) target = $region21
    $region20: #{tpu_custom_call.1} parent=1 // pred_region
      _
    $region21: #{tpu_custom_call.1} parent=1 // pred_fallthru
      _
    // Predicated region
    $region22: #{tpu_custom_call.1} parent=1 // pred_check
      _
    $region23: #{tpu_custom_call.1} parent=1 // pred_check_branch
      %23 = sbr.rel (0) target = $region25
    $region24: #{tpu_custom_call.1} parent=1 // pred_region
      _
    $region25: #{tpu_custom_call.1} parent=1 // pred_fallthru
      _
    %v25 = vld [vmem:[%s1] sm:$0xff]
    %v26 = vld [vmem:[%s1 + $0x8] sm:$0xff]
    %v27 = vld [vmem:[%s1 + $0x10] sm:$0xff]
    %v28 = vld [vmem:[%s1 + $0x18] sm:$0xff]
    loop: start=0, step=1, limit=10
    $region26: #{tpu_custom_call.1} parent=1 // loop_pre_header
      _
    $region27: #{tpu_custom_call.1} parent=1 // loop_header
      %s30 = sphi 0, %s34
      %p31 = scmp.ge.s32.totalorder %s30, 10
      %v35 = vphi %v25, %v86
      %v36 = vphi %v26, %v87
      %v37 = vphi %v27, %v88
      %v38 = vphi %v28, %v89
    $region28: #{tpu_custom_call.1} parent=1 // loop_header_branch
      %33 = sbr.rel (%p31) target = $region32
    $region29: #{tpu_custom_call.1} parent=1 // loop_body
      %vm39 = vcmask 130048
      %v40 = vsel %vm39, %v35, 0.0
      %41 = vadd.xlane.f32.xlu0 %v40
      %v42 = vpop.xlane.xlu0 %41
      %v43 = vsel %vm39, %v36, 0.0
      %44 = vadd.xlane.f32.xlu0 %v43
      %v45 = vpop.xlane.xlu0 %44
      %v46 = vsel %vm39, %v37, 0.0
      %47 = vadd.xlane.f32.xlu0 %v46
      %v48 = vpop.xlane.xlu0 %47
      %v49 = vsel %vm39, %v38, 0.0
      %50 = vadd.xlane.f32.xlu0 %v49
      %v51 = vpop.xlane.xlu0 %50
      %v52 = vadd.f32 %v42, 1e-08
      %v53 = vadd.f32 %v45, 1e-08
      %v54 = vadd.f32 %v48, 1e-08
      %v55 = vadd.f32 %v51, 1e-08
      %v56 = vrcp.pop %v52
      %v57 = vrcp.pop %v53
      %v58 = vrcp.pop %v54
      %v59 = vrcp.pop %v55
      %v60 = vmul.f32 %v35, %v56
      %v61 = vmul.f32 %v36, %v57
      %v62 = vmul.f32 %v37, %v58
      %v63 = vmul.f32 %v38, %v59
      %v64 = vsel %vm39, %v60, 0.0
      %v65 = vsel %vm39, %v61, 0.0
      %v66 = vadd.f32 %v64, %v65
      %v67 = vrot.slane %v66, 4
      %v68 = vadd.f32 %v66, %v67
      %v69 = vrot.slane %v68, 2
      %v70 = vadd.f32 %v68, %v69
      %v71 = vrot.slane %v70, 1
      %v72 = vadd.f32 %v70, %v71
      %v73 = vsel %vm39, %v62, 0.0
      %v74 = vsel %vm39, %v63, 0.0
      %v75 = vadd.f32 %v73, %v74
      %v76 = vrot.slane %v75, 4
      %v77 = vadd.f32 %v75, %v76
      %v78 = vrot.slane %v77, 2
      %v79 = vadd.f32 %v77, %v78
      %v80 = vrot.slane %v79, 1
      %v81 = vadd.f32 %v79, %v80
      %v82 = vadd.f32 %v72, 1e-08
      %v83 = vadd.f32 %v81, 1e-08
      %v84 = vrcp.pop %v82
      %v85 = vrcp.pop %v83
      %v86 = vmul.f32 %v60, %v84
      %v87 = vmul.f32 %v61, %v84
      %v88 = vmul.f32 %v62, %v85
      %v89 = vmul.f32 %v63, %v85
    $region30: #{tpu_custom_call.1} parent=1 // loop_footer
      %s34 = sadd.s32 1, %s30
    $region31: #{tpu_custom_call.1} parent=1 // loop_footer_branch
      %29 = sbr.rel target = $region27
    $region32: #{tpu_custom_call.1} parent=1 // loop_exit
      _
    %v90 = vld [vmem:[%s0] sm:$0xff]
    %v91 = vld [vmem:[%s0 + $0x8] sm:$0xff]
    %v92 = vld [vmem:[%s2] sm:$0xff]
    %v93 = vld [vmem:[%s2 + $0x8] sm:$0xff]
    %v94 = vld [vmem:[%s3] sm:$0xff]
    %v95 = vld [vmem:[%s3 + $0x8] sm:$0xff]
    %v96 = vld [vmem:[%s3 + $0x10] sm:$0xff]
    %v97 = vld [vmem:[%s3 + $0x18] sm:$0xff]
    %v98 = vld [vmem:[%s3 + $0x20] sm:$0xff]
    %v99 = vld [vmem:[%s3 + $0x28] sm:$0xff]
    %v100 = vld [vmem:[%s3 + $0x30] sm:$0xff]
    %v101 = vld [vmem:[%s3 + $0x38] sm:$0xff]
    %v102 = vpack.c.bf16 %v91, %v90
    %v103 = vpack.c.bf16 %v93, %v92
    %vm104 = vcmask 130048
    %v106 = vsel %vm104, %v102, 0
    %108 = vmatprep.subr.bf16.mxu0 0
    %109 = vmatpush1.bf16.msra.mxu0 0
    %110 = vmatprep.subr.bf16.mxu0 0
    %111 = vmatpush1.bf16.msra.mxu0 0
    %112 = vmatprep.subr.bf16.mxu0 0
    %113 = vmatpush1.bf16.msra.mxu0 0
    %114 = vmatprep.subr.bf16.mxu0 0
    %115 = vmatpush1.bf16.msra.mxu0 0
    %116 = vmatprep.subr.bf16.mxu0 0
    %117 = vmatpush1.bf16.msra.mxu0 0
    %118 = vmatprep.subr.bf16.mxu0 0
    %119 = vmatpush1.bf16.msra.mxu0 0
    %120 = vmatprep.subr.bf16.mxu0 0
    %121 = vmatpush1.bf16.msra.mxu0 0
    %122 = vmatprep.subr.bf16.mxu0 0
    %123 = vmatpush1.bf16.msra.mxu0 %v103
    %124 = vmatprep.subr.bf16.mxu0 0
    %125 = vmatpush2.bf16.msra.mxu0 0
    %126 = vmatprep.subr.bf16.mxu0 0
    %127 = vmatpush2.bf16.msra.mxu0 0
    %128 = vmatprep.subr.bf16.mxu0 0
    %129 = vmatpush2.bf16.msra.mxu0 0
    %130 = vmatprep.subr.bf16.mxu0 0
    %131 = vmatpush2.bf16.msra.mxu0 0
    %132 = vmatprep.subr.bf16.mxu0 0
    %133 = vmatpush2.bf16.msra.mxu0 0
    %134 = vmatprep.subr.bf16.mxu0 0
    %135 = vmatpush2.bf16.msra.mxu0 0
    %136 = vmatprep.subr.bf16.mxu0 0
    %137 = vmatpush2.bf16.msra.mxu0 0
    %138 = vmatprep.subr.bf16.mxu0 0
    %139 = vmatpush2.bf16.msra.mxu0 0
    %140 = vmatprep.mubr.bf16.mxu0 0
    %141 = vmatmul.mubr.bf16.gmra.mxu0 %v106
    %v142 = vpop.f32.mrf.mxu0
    %v143 = vadd.f32 0.0, %v142
    %v144 = vpop.f32.mrf.mxu0
    %v145 = vpop.f32.mrf.mxu0
    %v146 = vadd.f32 0.0, %v145
    %v147 = vpop.f32.mrf.mxu0
    %148 = vdwg.mxu0
    %v149 = vpack.c.bf16 %v146, %v143
    %v150 = vpack.c.bf16 %v95, %v94
    %v151 = vpack.c.bf16 %v97, %v96
    %v152 = vpack.c.bf16 %v99, %v98
    %v153 = vpack.c.bf16 %v101, %v100
    %vm154 = vcmask 523264
    %v156 = vsel %vm154, %v149, 0
    %158 = vmatprep.subr.bf16.mxu0 0
    %159 = vmatpush1.bf16.msra.mxu0 0
    %160 = vmatprep.subr.bf16.mxu0 0
    %161 = vmatpush1.bf16.msra.mxu0 0
    %162 = vmatprep.subr.bf16.mxu0 0
    %163 = vmatpush1.bf16.msra.mxu0 0
    %164 = vmatprep.subr.bf16.mxu0 0
    %165 = vmatpush1.bf16.msra.mxu0 0
    %166 = vmatprep.subr.bf16.mxu0 0
    %167 = vmatpush1.bf16.msra.mxu0 %v153
    %168 = vmatprep.subr.bf16.mxu0 0
    %169 = vmatpush1.bf16.msra.mxu0 %v152
    %170 = vmatprep.subr.bf16.mxu0 0
    %171 = vmatpush1.bf16.msra.mxu0 %v151
    %172 = vmatprep.subr.bf16.mxu0 0
    %173 = vmatpush1.bf16.msra.mxu0 %v150
    %174 = vmatprep.subr.bf16.mxu0 0
    %175 = vmatpush2.bf16.msra.mxu0 0
    %176 = vmatprep.subr.bf16.mxu0 0
    %177 = vmatpush2.bf16.msra.mxu0 0
    %178 = vmatprep.subr.bf16.mxu0 0
    %179 = vmatpush2.bf16.msra.mxu0 0
    %180 = vmatprep.subr.bf16.mxu0 0
    %181 = vmatpush2.bf16.msra.mxu0 0
    %182 = vmatprep.subr.bf16.mxu0 0
    %183 = vmatpush2.bf16.msra.mxu0 0
    %184 = vmatprep.subr.bf16.mxu0 0
    %185 = vmatpush2.bf16.msra.mxu0 0
    %186 = vmatprep.subr.bf16.mxu0 0
    %187 = vmatpush2.bf16.msra.mxu0 0
    %188 = vmatprep.subr.bf16.mxu0 0
    %189 = vmatpush2.bf16.msra.mxu0 0
    %190 = vmatprep.mubr.bf16.mxu0 0
    %191 = vmatmul.mubr.bf16.gmra.mxu0 %v156
    %v192 = vpop.f32.mrf.mxu0
    %v193 = vadd.f32 0.0, %v192
    %v194 = vpop.f32.mrf.mxu0
    %v195 = vpop.f32.mrf.mxu0
    %v196 = vadd.f32 0.0, %v195
    %v197 = vpop.f32.mrf.mxu0
    %198 = vdwg.mxu0
    %201 = vrot.lane.b32.xlu0 %v193, 127
    %v202 = vpop.permute.xlu0 %201
    %203 = vrot.lane.b32.xlu0 %v196, 127
    %v204 = vpop.permute.xlu0 %203
    %207 = vxpose.xlu0.b32.start [1/16] %v202, 128
    %208 = vxpose.xlu0.b32.cont [2/16] %v204, 128
    %209 = vxpose.xlu0.b32.cont [3/16] 0.0, 128
    %210 = vxpose.xlu0.b32.cont [4/16] 0.0, 128
    %211 = vxpose.xlu0.b32.cont [5/16] 0.0, 128
    %212 = vxpose.xlu0.b32.cont [6/16] 0.0, 128
    %213 = vxpose.xlu0.b32.cont [7/16] 0.0, 128
    %214 = vxpose.xlu0.b32.cont [8/16] 0.0, 128
    %215 = vxpose.xlu0.b32.cont [9/16] 0.0, 128
    %216 = vxpose.xlu0.b32.cont [10/16] 0.0, 128
    %217 = vxpose.xlu0.b32.cont [11/16] 0.0, 128
    %218 = vxpose.xlu0.b32.cont [12/16] 0.0, 128
    %219 = vxpose.xlu0.b32.cont [13/16] 0.0, 128
    %220 = vxpose.xlu0.b32.cont [14/16] 0.0, 128
    %221 = vxpose.xlu0.b32.cont [15/16] 0.0, 128
    %222 = vxpose.xlu0.b32.end [16/16] 0.0, 128
    %v223 = vpop.trf.xlu0
    %v224 = vpop.trf.xlu0
    %v225 = vpop.trf.xlu0
    %v226 = vpop.trf.xlu0
    %v227 = vpop.trf.xlu0
    %v228 = vpop.trf.xlu0
    %v229 = vpop.trf.xlu0
    %v230 = vpop.trf.xlu0
    %v231 = vpop.trf.xlu0
    %v232 = vpop.trf.xlu0
    %v233 = vpop.trf.xlu0
    %v234 = vpop.trf.xlu0
    %v235 = vpop.trf.xlu0
    %v236 = vpop.trf.xlu0
    %v237 = vpop.trf.xlu0
    %v238 = vpop.trf.xlu0
    %239 = vset.pattern.permute.xlu0 0
    %240 = vperm.xlu0 %239, %v193
    %v241 = vpop.permute.xlu0 %240
    %243 = vset.pattern.permute.xlu0 0
    %244 = vperm.xlu0 %243, %v196
    %v245 = vpop.permute.xlu0 %244
    %v247 = vlaneseq
    %v248 = vshrl.u32 %v247, 7
    %v249 = vsub.s32 0, %v248
    %v250 = vrot.slane %v223, %v249
    %v251 = vadd.f32 %v241, %v250
    %v252 = vadd.f32 %v245, %v250
    %v253 = vmul.f32 %v251, 0.2
    %v254 = vmul.f32 %v252, 0.2
    %v255 = vmax.f32 %v251, %v253
    %v256 = vmax.f32 %v252, %v254
    %vm257 = vcmp.gt.f32.partialorder %v35, 0.0
    %vm258 = vcmp.gt.f32.partialorder %v36, 0.0
    %v259 = vsel %vm257, %v255, -9e+15
    %v260 = vsel %vm258, %v256, -9e+15
    %v261 = vsel %vm104, %v259, -inf
    %262 = vmax.xlane.f32.xlu0 %v261
    %v263 = vpop.xlane.xlu0 %262
    %v264 = vsel %vm104, %v260, -inf
    %265 = vmax.xlane.f32.xlu0 %v264
    %v266 = vpop.xlane.xlu0 %265
    %v267 = vsub.f32 %v259, %v263
    %v268 = vsub.f32 %v260, %v266
    %v269 = vmul.f32 %v267, 1.442695
    %v270 = vpow.pop %v269
    %v271 = vmul.f32 %v268, 1.442695
    %v272 = vpow.pop %v271
    %v273 = vsel %vm104, %v270, 0.0
    %274 = vadd.xlane.f32.xlu0 %v273
    %v275 = vpop.xlane.xlu0 %274
    %v276 = vsel %vm104, %v272, 0.0
    %277 = vadd.xlane.f32.xlu0 %v276
    %v278 = vpop.xlane.xlu0 %277
    %v279 = vrcp.pop %v275
    %v280 = vrcp.pop %v278
    %v281 = vmul.f32 %v270, %v279
    %v282 = vmul.f32 %v272, %v280
    %v283 = vpack.c.bf16 %v282, %v281
    %v285 = vsel %vm104, %v283, 0
    %287 = vmatprep.subr.bf16.mxu0 0
    %288 = vmatpush1.bf16.msra.mxu0 0
    %289 = vmatprep.subr.bf16.mxu0 0
    %290 = vmatpush1.bf16.msra.mxu0 0
    %291 = vmatprep.subr.bf16.mxu0 0
    %292 = vmatpush1.bf16.msra.mxu0 0
    %293 = vmatprep.subr.bf16.mxu0 0
    %294 = vmatpush1.bf16.msra.mxu0 0
    %295 = vmatprep.subr.bf16.mxu0 0
    %296 = vmatpush1.bf16.msra.mxu0 0
    %297 = vmatprep.subr.bf16.mxu0 0
    %298 = vmatpush1.bf16.msra.mxu0 0
    %299 = vmatprep.subr.bf16.mxu0 0
    %300 = vmatpush1.bf16.msra.mxu0 0
    %301 = vmatprep.subr.bf16.mxu0 0
    %302 = vmatpush1.bf16.msra.mxu0 %v149
    %303 = vmatprep.subr.bf16.mxu0 0
    %304 = vmatpush2.bf16.msra.mxu0 0
    %305 = vmatprep.subr.bf16.mxu0 0
    %306 = vmatpush2.bf16.msra.mxu0 0
    %307 = vmatprep.subr.bf16.mxu0 0
    %308 = vmatpush2.bf16.msra.mxu0 0
    %309 = vmatprep.subr.bf16.mxu0 0
    %310 = vmatpush2.bf16.msra.mxu0 0
    %311 = vmatprep.subr.bf16.mxu0 0
    %312 = vmatpush2.bf16.msra.mxu0 0
    %313 = vmatprep.subr.bf16.mxu0 0
    %314 = vmatpush2.bf16.msra.mxu0 0
    %315 = vmatprep.subr.bf16.mxu0 0
    %316 = vmatpush2.bf16.msra.mxu0 0
    %317 = vmatprep.subr.bf16.mxu0 0
    %318 = vmatpush2.bf16.msra.mxu0 0
    %319 = vmatprep.mubr.bf16.mxu0 0
    %320 = vmatmul.mubr.bf16.gmra.mxu0 %v285
    %v321 = vpop.f32.mrf.mxu0
    %v322 = vadd.f32 0.0, %v321
    %v323 = vpop.f32.mrf.mxu0
    %v324 = vpop.f32.mrf.mxu0
    %v325 = vadd.f32 0.0, %v324
    %v326 = vpop.f32.mrf.mxu0
    %327 = vdwg.mxu0
    %vm328 = vcmp.gt.f32.partialorder %v322, 0.0
    %vm329 = vcmp.gt.f32.partialorder %v325, 0.0
    %v330 = vmin.f32 %v322, 0.0
    %v331 = vmin.f32 %v325, 0.0
    %v332 = vmul.f32 %v330, 1.442695
    %v333 = vpow.pop %v332
    %v334 = vmul.f32 %v331, 1.442695
    %v335 = vpow.pop %v334
    %v336 = vsub.f32 %v333, 1.0
    %v337 = vsub.f32 %v335, 1.0
    %v338 = vsel %vm328, %v322, %v336
    %v339 = vsel %vm329, %v325, %v337
    %340 = vrot.lane.b32.xlu0 %v193, 125
    %v341 = vpop.permute.xlu0 %340
    %342 = vrot.lane.b32.xlu0 %v196, 125
    %v343 = vpop.permute.xlu0 %342
    %346 = vxpose.xlu0.b32.start [1/16] %v341, 128
    %347 = vxpose.xlu0.b32.cont [2/16] %v343, 128
    %348 = vxpose.xlu0.b32.cont [3/16] 0.0, 128
    %349 = vxpose.xlu0.b32.cont [4/16] 0.0, 128
    %350 = vxpose.xlu0.b32.cont [5/16] 0.0, 128
    %351 = vxpose.xlu0.b32.cont [6/16] 0.0, 128
    %352 = vxpose.xlu0.b32.cont [7/16] 0.0, 128
    %353 = vxpose.xlu0.b32.cont [8/16] 0.0, 128
    %354 = vxpose.xlu0.b32.cont [9/16] 0.0, 128
    %355 = vxpose.xlu0.b32.cont [10/16] 0.0, 128
    %356 = vxpose.xlu0.b32.cont [11/16] 0.0, 128
    %357 = vxpose.xlu0.b32.cont [12/16] 0.0, 128
    %358 = vxpose.xlu0.b32.cont [13/16] 0.0, 128
    %359 = vxpose.xlu0.b32.cont [14/16] 0.0, 128
    %360 = vxpose.xlu0.b32.cont [15/16] 0.0, 128
    %361 = vxpose.xlu0.b32.end [16/16] 0.0, 128
    %v362 = vpop.trf.xlu0
    %v363 = vpop.trf.xlu0
    %v364 = vpop.trf.xlu0
    %v365 = vpop.trf.xlu0
    %v366 = vpop.trf.xlu0
    %v367 = vpop.trf.xlu0
    %v368 = vpop.trf.xlu0
    %v369 = vpop.trf.xlu0
    %v370 = vpop.trf.xlu0
    %v371 = vpop.trf.xlu0
    %v372 = vpop.trf.xlu0
    %v373 = vpop.trf.xlu0
    %v374 = vpop.trf.xlu0
    %v375 = vpop.trf.xlu0
    %v376 = vpop.trf.xlu0
    %v377 = vpop.trf.xlu0
    %378 = vset.pattern.permute.xlu0 2
    %379 = vperm.xlu0 %378, %v193
    %v380 = vpop.permute.xlu0 %379
    %382 = vset.pattern.permute.xlu0 2
    %383 = vperm.xlu0 %382, %v196
    %v384 = vpop.permute.xlu0 %383
    %v386 = vlaneseq
    %v387 = vshrl.u32 %v386, 7
    %v388 = vsub.s32 0, %v387
    %v389 = vrot.slane %v362, %v388
    %v390 = vadd.f32 %v380, %v389
    %v391 = vadd.f32 %v384, %v389
    %v392 = vmul.f32 %v390, 0.2
    %v393 = vmul.f32 %v391, 0.2
    %v394 = vmax.f32 %v390, %v392
    %v395 = vmax.f32 %v391, %v393
    %vm396 = vcmp.gt.f32.partialorder %v37, 0.0
    %vm397 = vcmp.gt.f32.partialorder %v38, 0.0
    %v398 = vsel %vm396, %v394, -9e+15
    %v399 = vsel %vm397, %v395, -9e+15
    %v400 = vsel %vm104, %v398, -inf
    %401 = vmax.xlane.f32.xlu0 %v400
    %v402 = vpop.xlane.xlu0 %401
    %v403 = vsel %vm104, %v399, -inf
    %404 = vmax.xlane.f32.xlu0 %v403
    %v405 = vpop.xlane.xlu0 %404
    %v406 = vsub.f32 %v398, %v402
    %v407 = vsub.f32 %v399, %v405
    %v408 = vmul.f32 %v406, 1.442695
    %v409 = vpow.pop %v408
    %v410 = vmul.f32 %v407, 1.442695
    %v411 = vpow.pop %v410
    %v412 = vsel %vm104, %v409, 0.0
    %413 = vadd.xlane.f32.xlu0 %v412
    %v414 = vpop.xlane.xlu0 %413
    %v415 = vsel %vm104, %v411, 0.0
    %416 = vadd.xlane.f32.xlu0 %v415
    %v417 = vpop.xlane.xlu0 %416
    %v418 = vrcp.pop %v414
    %v419 = vrcp.pop %v417
    %v420 = vmul.f32 %v409, %v418
    %v421 = vmul.f32 %v411, %v419
    %v422 = vpack.c.bf16 %v421, %v420
    %424 = vrot.lane.b32.xlu0 %v149, 96
    %v425 = vpop.permute.xlu0 %424
    %v428 = vsel %vm104, %v422, 0
    %430 = vmatprep.subr.bf16.mxu0 0
    %431 = vmatpush1.bf16.msra.mxu0 0
    %432 = vmatprep.subr.bf16.mxu0 0
    %433 = vmatpush1.bf16.msra.mxu0 0
    %434 = vmatprep.subr.bf16.mxu0 0
    %435 = vmatpush1.bf16.msra.mxu0 0
    %436 = vmatprep.subr.bf16.mxu0 0
    %437 = vmatpush1.bf16.msra.mxu0 0
    %438 = vmatprep.subr.bf16.mxu0 0
    %439 = vmatpush1.bf16.msra.mxu0 0
    %440 = vmatprep.subr.bf16.mxu0 0
    %441 = vmatpush1.bf16.msra.mxu0 0
    %442 = vmatprep.subr.bf16.mxu0 0
    %443 = vmatpush1.bf16.msra.mxu0 0
    %444 = vmatprep.subr.bf16.mxu0 0
    %445 = vmatpush1.bf16.msra.mxu0 %v425
    %446 = vmatprep.subr.bf16.mxu0 0
    %447 = vmatpush2.bf16.msra.mxu0 0
    %448 = vmatprep.subr.bf16.mxu0 0
    %449 = vmatpush2.bf16.msra.mxu0 0
    %450 = vmatprep.subr.bf16.mxu0 0
    %451 = vmatpush2.bf16.msra.mxu0 0
    %452 = vmatprep.subr.bf16.mxu0 0
    %453 = vmatpush2.bf16.msra.mxu0 0
    %454 = vmatprep.subr.bf16.mxu0 0
    %455 = vmatpush2.bf16.msra.mxu0 0
    %456 = vmatprep.subr.bf16.mxu0 0
    %457 = vmatpush2.bf16.msra.mxu0 0
    %458 = vmatprep.subr.bf16.mxu0 0
    %459 = vmatpush2.bf16.msra.mxu0 0
    %460 = vmatprep.subr.bf16.mxu0 0
    %461 = vmatpush2.bf16.msra.mxu0 0
    %462 = vmatprep.mubr.bf16.mxu0 0
    %463 = vmatmul.mubr.bf16.gmra.mxu0 %v428
    %v464 = vpop.f32.mrf.mxu0
    %v465 = vadd.f32 0.0, %v464
    %v466 = vpop.f32.mrf.mxu0
    %v467 = vpop.f32.mrf.mxu0
    %v468 = vadd.f32 0.0, %v467
    %v469 = vpop.f32.mrf.mxu0
    %470 = vdwg.mxu0
    %vm471 = vcmp.gt.f32.partialorder %v465, 0.0
    %vm472 = vcmp.gt.f32.partialorder %v468, 0.0
    %v473 = vmin.f32 %v465, 0.0
    %v474 = vmin.f32 %v468, 0.0
    %v475 = vmul.f32 %v473, 1.442695
    %v476 = vpow.pop %v475
    %v477 = vmul.f32 %v474, 1.442695
    %v478 = vpow.pop %v477
    %v479 = vsub.f32 %v476, 1.0
    %v480 = vsub.f32 %v478, 1.0
    %v481 = vsel %vm471, %v465, %v479
    %v482 = vsel %vm472, %v468, %v480
    %485 = vrot.lane.b32.xlu0 %v481, 32
    %v486 = vpop.permute.xlu0 %485
    %487 = vrot.lane.b32.xlu0 %v482, 32
    %v488 = vpop.permute.xlu0 %487
    %vm491 = vcmask 261120
    %v492 = vsel %vm491, %v338, %v486
    %v493 = vsel %vm491, %v339, %v488
    %vm494 = vcmp.gt.f32.partialorder %v492, 0.0
    %vm495 = vcmp.gt.f32.partialorder %v493, 0.0
    %v496 = vmin.f32 %v492, 0.0
    %v497 = vmin.f32 %v493, 0.0
    %v498 = vmul.f32 %v496, 1.442695
    %v499 = vpow.pop %v498
    %v500 = vmul.f32 %v497, 1.442695
    %v501 = vpow.pop %v500
    %v502 = vsub.f32 %v499, 1.0
    %v503 = vsub.f32 %v501, 1.0
    %v504 = vsel %vm494, %v492, %v502
    %v505 = vsel %vm495, %v493, %v503
    %v506 = vld [vmem:[%s4] sm:$0xff]
    %v507 = vld [vmem:[%s4 + $0x8] sm:$0xff]
    %v508 = vld [vmem:[%s4 + $0x10] sm:$0xff]
    %v509 = vld [vmem:[%s4 + $0x18] sm:$0xff]
    %v510 = vld [vmem:[%s4 + $0x20] sm:$0xff]
    %v511 = vld [vmem:[%s4 + $0x28] sm:$0xff]
    %v512 = vld [vmem:[%s4 + $0x30] sm:$0xff]
    %v513 = vld [vmem:[%s4 + $0x38] sm:$0xff]
    %v514 = vld [vmem:[%s5] sm:$0xff]
    %v515 = vld [vmem:[%s5 + $0x8] sm:$0xff]
    %v516 = vld [vmem:[%s5 + $0x10] sm:$0xff]
    %v517 = vld [vmem:[%s5 + $0x18] sm:$0xff]
    %v518 = vld [vmem:[%s5 + $0x20] sm:$0xff]
    %v519 = vld [vmem:[%s5 + $0x28] sm:$0xff]
    %v520 = vld [vmem:[%s5 + $0x30] sm:$0xff]
    %v521 = vld [vmem:[%s5 + $0x38] sm:$0xff]
    %v522 = vpack.c.bf16 %v505, %v504
    %v523 = vpack.c.bf16 %v507, %v506
    %v524 = vpack.c.bf16 %v509, %v508
    %v525 = vpack.c.bf16 %v511, %v510
    %v526 = vpack.c.bf16 %v513, %v512
    %v528 = vsel %vm154, %v522, 0
    %530 = vmatprep.subr.bf16.mxu0 0
    %531 = vmatpush1.bf16.msra.mxu0 0
    %532 = vmatprep.subr.bf16.mxu0 0
    %533 = vmatpush1.bf16.msra.mxu0 0
    %534 = vmatprep.subr.bf16.mxu0 0
    %535 = vmatpush1.bf16.msra.mxu0 0
    %536 = vmatprep.subr.bf16.mxu0 0
    %537 = vmatpush1.bf16.msra.mxu0 0
    %538 = vmatprep.subr.bf16.mxu0 0
    %539 = vmatpush1.bf16.msra.mxu0 %v526
    %540 = vmatprep.subr.bf16.mxu0 0
    %541 = vmatpush1.bf16.msra.mxu0 %v525
    %542 = vmatprep.subr.bf16.mxu0 0
    %543 = vmatpush1.bf16.msra.mxu0 %v524
    %544 = vmatprep.subr.bf16.mxu0 0
    %545 = vmatpush1.bf16.msra.mxu0 %v523
    %546 = vmatprep.subr.bf16.mxu0 0
    %547 = vmatpush2.bf16.msra.mxu0 0
    %548 = vmatprep.subr.bf16.mxu0 0
    %549 = vmatpush2.bf16.msra.mxu0 0
    %550 = vmatprep.subr.bf16.mxu0 0
    %551 = vmatpush2.bf16.msra.mxu0 0
    %552 = vmatprep.subr.bf16.mxu0 0
    %553 = vmatpush2.bf16.msra.mxu0 0
    %554 = vmatprep.subr.bf16.mxu0 0
    %555 = vmatpush2.bf16.msra.mxu0 0
    %556 = vmatprep.subr.bf16.mxu0 0
    %557 = vmatpush2.bf16.msra.mxu0 0
    %558 = vmatprep.subr.bf16.mxu0 0
    %559 = vmatpush2.bf16.msra.mxu0 0
    %560 = vmatprep.subr.bf16.mxu0 0
    %561 = vmatpush2.bf16.msra.mxu0 0
    %562 = vmatprep.mubr.bf16.mxu0 0
    %563 = vmatmul.mubr.bf16.gmra.mxu0 %v528
    %v564 = vpop.f32.mrf.mxu0
    %v565 = vadd.f32 0.0, %v564
    %v566 = vpop.f32.mrf.mxu0
    %v567 = vpop.f32.mrf.mxu0
    %v568 = vadd.f32 0.0, %v567
    %v569 = vpop.f32.mrf.mxu0
    %570 = vdwg.mxu0
    %v571 = vpack.c.bf16 %v568, %v565
    %v572 = vpack.c.bf16 %v515, %v514
    %v573 = vpack.c.bf16 %v517, %v516
    %v574 = vpack.c.bf16 %v519, %v518
    %v575 = vpack.c.bf16 %v521, %v520
    %v577 = vsel %vm154, %v571, 0
    %579 = vmatprep.subr.bf16.mxu0 0
    %580 = vmatpush1.bf16.msra.mxu0 0
    %581 = vmatprep.subr.bf16.mxu0 0
    %582 = vmatpush1.bf16.msra.mxu0 0
    %583 = vmatprep.subr.bf16.mxu0 0
    %584 = vmatpush1.bf16.msra.mxu0 0
    %585 = vmatprep.subr.bf16.mxu0 0
    %586 = vmatpush1.bf16.msra.mxu0 0
    %587 = vmatprep.subr.bf16.mxu0 0
    %588 = vmatpush1.bf16.msra.mxu0 %v575
    %589 = vmatprep.subr.bf16.mxu0 0
    %590 = vmatpush1.bf16.msra.mxu0 %v574
    %591 = vmatprep.subr.bf16.mxu0 0
    %592 = vmatpush1.bf16.msra.mxu0 %v573
    %593 = vmatprep.subr.bf16.mxu0 0
    %594 = vmatpush1.bf16.msra.mxu0 %v572
    %595 = vmatprep.subr.bf16.mxu0 0
    %596 = vmatpush2.bf16.msra.mxu0 0
    %597 = vmatprep.subr.bf16.mxu0 0
    %598 = vmatpush2.bf16.msra.mxu0 0
    %599 = vmatprep.subr.bf16.mxu0 0
    %600 = vmatpush2.bf16.msra.mxu0 0
    %601 = vmatprep.subr.bf16.mxu0 0
    %602 = vmatpush2.bf16.msra.mxu0 0
    %603 = vmatprep.subr.bf16.mxu0 0
    %604 = vmatpush2.bf16.msra.mxu0 0
    %605 = vmatprep.subr.bf16.mxu0 0
    %606 = vmatpush2.bf16.msra.mxu0 0
    %607 = vmatprep.subr.bf16.mxu0 0
    %608 = vmatpush2.bf16.msra.mxu0 0
    %609 = vmatprep.subr.bf16.mxu0 0
    %610 = vmatpush2.bf16.msra.mxu0 0
    %611 = vmatprep.mubr.bf16.mxu0 0
    %612 = vmatmul.mubr.bf16.gmra.mxu0 %v577
    %v613 = vpop.f32.mrf.mxu0
    %v614 = vadd.f32 0.0, %v613
    %v615 = vpop.f32.mrf.mxu0
    %v616 = vpop.f32.mrf.mxu0
    %v617 = vadd.f32 0.0, %v616
    %v618 = vpop.f32.mrf.mxu0
    %619 = vdwg.mxu0
    %622 = vrot.lane.b32.xlu0 %v614, 127
    %v623 = vpop.permute.xlu0 %622
    %624 = vrot.lane.b32.xlu0 %v617, 127
    %v625 = vpop.permute.xlu0 %624
    %628 = vxpose.xlu0.b32.start [1/16] %v623, 128
    %629 = vxpose.xlu0.b32.cont [2/16] %v625, 128
    %630 = vxpose.xlu0.b32.cont [3/16] 0.0, 128
    %631 = vxpose.xlu0.b32.cont [4/16] 0.0, 128
    %632 = vxpose.xlu0.b32.cont [5/16] 0.0, 128
    %633 = vxpose.xlu0.b32.cont [6/16] 0.0, 128
    %634 = vxpose.xlu0.b32.cont [7/16] 0.0, 128
    %635 = vxpose.xlu0.b32.cont [8/16] 0.0, 128
    %636 = vxpose.xlu0.b32.cont [9/16] 0.0, 128
    %637 = vxpose.xlu0.b32.cont [10/16] 0.0, 128
    %638 = vxpose.xlu0.b32.cont [11/16] 0.0, 128
    %639 = vxpose.xlu0.b32.cont [12/16] 0.0, 128
    %640 = vxpose.xlu0.b32.cont [13/16] 0.0, 128
    %641 = vxpose.xlu0.b32.cont [14/16] 0.0, 128
    %642 = vxpose.xlu0.b32.cont [15/16] 0.0, 128
    %643 = vxpose.xlu0.b32.end [16/16] 0.0, 128
    %v644 = vpop.trf.xlu0
    %v645 = vpop.trf.xlu0
    %v646 = vpop.trf.xlu0
    %v647 = vpop.trf.xlu0
    %v648 = vpop.trf.xlu0
    %v649 = vpop.trf.xlu0
    %v650 = vpop.trf.xlu0
    %v651 = vpop.trf.xlu0
    %v652 = vpop.trf.xlu0
    %v653 = vpop.trf.xlu0
    %v654 = vpop.trf.xlu0
    %v655 = vpop.trf.xlu0
    %v656 = vpop.trf.xlu0
    %v657 = vpop.trf.xlu0
    %v658 = vpop.trf.xlu0
    %v659 = vpop.trf.xlu0
    %660 = vset.pattern.permute.xlu0 0
    %661 = vperm.xlu0 %660, %v614
    %v662 = vpop.permute.xlu0 %661
    %664 = vset.pattern.permute.xlu0 0
    %665 = vperm.xlu0 %664, %v617
    %v666 = vpop.permute.xlu0 %665
    %v668 = vlaneseq
    %v669 = vshrl.u32 %v668, 7
    %v670 = vsub.s32 0, %v669
    %v671 = vrot.slane %v644, %v670
    %v672 = vadd.f32 %v662, %v671
    %v673 = vadd.f32 %v666, %v671
    %v674 = vmul.f32 %v672, 0.2
    %v675 = vmul.f32 %v673, 0.2
    %v676 = vmax.f32 %v672, %v674
    %v677 = vmax.f32 %v673, %v675
    %vm678 = vcmp.gt.f32.partialorder %v281, 0.0
    %vm679 = vcmp.gt.f32.partialorder %v282, 0.0
    %v680 = vsel %vm678, %v676, -9e+15
    %v681 = vsel %vm679, %v677, -9e+15
    %v682 = vsel %vm104, %v680, -inf
    %683 = vmax.xlane.f32.xlu0 %v682
    %v684 = vpop.xlane.xlu0 %683
    %v685 = vsel %vm104, %v681, -inf
    %686 = vmax.xlane.f32.xlu0 %v685
    %v687 = vpop.xlane.xlu0 %686
    %v688 = vsub.f32 %v680, %v684
    %v689 = vsub.f32 %v681, %v687
    %v690 = vmul.f32 %v688, 1.442695
    %v691 = vpow.pop %v690
    %v692 = vmul.f32 %v689, 1.442695
    %v693 = vpow.pop %v692
    %v694 = vsel %vm104, %v691, 0.0
    %695 = vadd.xlane.f32.xlu0 %v694
    %v696 = vpop.xlane.xlu0 %695
    %v697 = vsel %vm104, %v693, 0.0
    %698 = vadd.xlane.f32.xlu0 %v697
    %v699 = vpop.xlane.xlu0 %698
    %v700 = vrcp.pop %v696
    %v701 = vrcp.pop %v699
    %v702 = vmul.f32 %v691, %v700
    %v703 = vmul.f32 %v693, %v701
    %v704 = vpack.c.bf16 %v703, %v702
    %v706 = vsel %vm104, %v704, 0
    %708 = vmatprep.subr.bf16.mxu0 0
    %709 = vmatpush1.bf16.msra.mxu0 0
    %710 = vmatprep.subr.bf16.mxu0 0
    %711 = vmatpush1.bf16.msra.mxu0 0
    %712 = vmatprep.subr.bf16.mxu0 0
    %713 = vmatpush1.bf16.msra.mxu0 0
    %714 = vmatprep.subr.bf16.mxu0 0
    %715 = vmatpush1.bf16.msra.mxu0 0
    %716 = vmatprep.subr.bf16.mxu0 0
    %717 = vmatpush1.bf16.msra.mxu0 0
    %718 = vmatprep.subr.bf16.mxu0 0
    %719 = vmatpush1.bf16.msra.mxu0 0
    %720 = vmatprep.subr.bf16.mxu0 0
    %721 = vmatpush1.bf16.msra.mxu0 0
    %722 = vmatprep.subr.bf16.mxu0 0
    %723 = vmatpush1.bf16.msra.mxu0 %v571
    %724 = vmatprep.subr.bf16.mxu0 0
    %725 = vmatpush2.bf16.msra.mxu0 0
    %726 = vmatprep.subr.bf16.mxu0 0
    %727 = vmatpush2.bf16.msra.mxu0 0
    %728 = vmatprep.subr.bf16.mxu0 0
    %729 = vmatpush2.bf16.msra.mxu0 0
    %730 = vmatprep.subr.bf16.mxu0 0
    %731 = vmatpush2.bf16.msra.mxu0 0
    %732 = vmatprep.subr.bf16.mxu0 0
    %733 = vmatpush2.bf16.msra.mxu0 0
    %734 = vmatprep.subr.bf16.mxu0 0
    %735 = vmatpush2.bf16.msra.mxu0 0
    %736 = vmatprep.subr.bf16.mxu0 0
    %737 = vmatpush2.bf16.msra.mxu0 0
    %738 = vmatprep.subr.bf16.mxu0 0
    %739 = vmatpush2.bf16.msra.mxu0 0
    %740 = vmatprep.mubr.bf16.mxu0 0
    %741 = vmatmul.mubr.bf16.gmra.mxu0 %v706
    %v742 = vpop.f32.mrf.mxu0
    %v743 = vadd.f32 0.0, %v742
    %v744 = vpop.f32.mrf.mxu0
    %v745 = vpop.f32.mrf.mxu0
    %v746 = vadd.f32 0.0, %v745
    %v747 = vpop.f32.mrf.mxu0
    %748 = vdwg.mxu0
    %vm749 = vcmp.gt.f32.partialorder %v743, 0.0
    %vm750 = vcmp.gt.f32.partialorder %v746, 0.0
    %v751 = vmin.f32 %v743, 0.0
    %v752 = vmin.f32 %v746, 0.0
    %v753 = vmul.f32 %v751, 1.442695
    %v754 = vpow.pop %v753
    %v755 = vmul.f32 %v752, 1.442695
    %v756 = vpow.pop %v755
    %v757 = vsub.f32 %v754, 1.0
    %v758 = vsub.f32 %v756, 1.0
    %v759 = vsel %vm749, %v743, %v757
    %v760 = vsel %vm750, %v746, %v758
    %761 = vrot.lane.b32.xlu0 %v614, 125
    %v762 = vpop.permute.xlu0 %761
    %763 = vrot.lane.b32.xlu0 %v617, 125
    %v764 = vpop.permute.xlu0 %763
    %767 = vxpose.xlu0.b32.start [1/16] %v762, 128
    %768 = vxpose.xlu0.b32.cont [2/16] %v764, 128
    %769 = vxpose.xlu0.b32.cont [3/16] 0.0, 128
    %770 = vxpose.xlu0.b32.cont [4/16] 0.0, 128
    %771 = vxpose.xlu0.b32.cont [5/16] 0.0, 128
    %772 = vxpose.xlu0.b32.cont [6/16] 0.0, 128
    %773 = vxpose.xlu0.b32.cont [7/16] 0.0, 128
    %774 = vxpose.xlu0.b32.cont [8/16] 0.0, 128
    %775 = vxpose.xlu0.b32.cont [9/16] 0.0, 128
    %776 = vxpose.xlu0.b32.cont [10/16] 0.0, 128
    %777 = vxpose.xlu0.b32.cont [11/16] 0.0, 128
    %778 = vxpose.xlu0.b32.cont [12/16] 0.0, 128
    %779 = vxpose.xlu0.b32.cont [13/16] 0.0, 128
    %780 = vxpose.xlu0.b32.cont [14/16] 0.0, 128
    %781 = vxpose.xlu0.b32.cont [15/16] 0.0, 128
    %782 = vxpose.xlu0.b32.end [16/16] 0.0, 128
    %v783 = vpop.trf.xlu0
    %v784 = vpop.trf.xlu0
    %v785 = vpop.trf.xlu0
    %v786 = vpop.trf.xlu0
    %v787 = vpop.trf.xlu0
    %v788 = vpop.trf.xlu0
    %v789 = vpop.trf.xlu0
    %v790 = vpop.trf.xlu0
    %v791 = vpop.trf.xlu0
    %v792 = vpop.trf.xlu0
    %v793 = vpop.trf.xlu0
    %v794 = vpop.trf.xlu0
    %v795 = vpop.trf.xlu0
    %v796 = vpop.trf.xlu0
    %v797 = vpop.trf.xlu0
    %v798 = vpop.trf.xlu0
    %799 = vset.pattern.permute.xlu0 2
    %800 = vperm.xlu0 %799, %v614
    %v801 = vpop.permute.xlu0 %800
    %803 = vset.pattern.permute.xlu0 2
    %804 = vperm.xlu0 %803, %v617
    %v805 = vpop.permute.xlu0 %804
    %v807 = vlaneseq
    %v808 = vshrl.u32 %v807, 7
    %v809 = vsub.s32 0, %v808
    %v810 = vrot.slane %v783, %v809
    %v811 = vadd.f32 %v801, %v810
    %v812 = vadd.f32 %v805, %v810
    %v813 = vmul.f32 %v811, 0.2
    %v814 = vmul.f32 %v812, 0.2
    %v815 = vmax.f32 %v811, %v813
    %v816 = vmax.f32 %v812, %v814
    %vm817 = vcmp.gt.f32.partialorder %v420, 0.0
    %vm818 = vcmp.gt.f32.partialorder %v421, 0.0
    %v819 = vsel %vm817, %v815, -9e+15
    %v820 = vsel %vm818, %v816, -9e+15
    %v821 = vsel %vm104, %v819, -inf
    %822 = vmax.xlane.f32.xlu0 %v821
    %v823 = vpop.xlane.xlu0 %822
    %v824 = vsel %vm104, %v820, -inf
    %825 = vmax.xlane.f32.xlu0 %v824
    %v826 = vpop.xlane.xlu0 %825
    %v827 = vsub.f32 %v819, %v823
    %v828 = vsub.f32 %v820, %v826
    %v829 = vmul.f32 %v827, 1.442695
    %v830 = vpow.pop %v829
    %v831 = vmul.f32 %v828, 1.442695
    %v832 = vpow.pop %v831
    %v833 = vsel %vm104, %v830, 0.0
    %834 = vadd.xlane.f32.xlu0 %v833
    %v835 = vpop.xlane.xlu0 %834
    %v836 = vsel %vm104, %v832, 0.0
    %837 = vadd.xlane.f32.xlu0 %v836
    %v838 = vpop.xlane.xlu0 %837
    %v839 = vrcp.pop %v835
    %v840 = vrcp.pop %v838
    %v841 = vmul.f32 %v830, %v839
    %v842 = vmul.f32 %v832, %v840
    %v843 = vpack.c.bf16 %v842, %v841
    %845 = vrot.lane.b32.xlu0 %v571, 96
    %v846 = vpop.permute.xlu0 %845
    %v849 = vsel %vm104, %v843, 0
    %851 = vmatprep.subr.bf16.mxu0 0
    %852 = vmatpush1.bf16.msra.mxu0 0
    %853 = vmatprep.subr.bf16.mxu0 0
    %854 = vmatpush1.bf16.msra.mxu0 0
    %855 = vmatprep.subr.bf16.mxu0 0
    %856 = vmatpush1.bf16.msra.mxu0 0
    %857 = vmatprep.subr.bf16.mxu0 0
    %858 = vmatpush1.bf16.msra.mxu0 0
    %859 = vmatprep.subr.bf16.mxu0 0
    %860 = vmatpush1.bf16.msra.mxu0 0
    %861 = vmatprep.subr.bf16.mxu0 0
    %862 = vmatpush1.bf16.msra.mxu0 0
    %863 = vmatprep.subr.bf16.mxu0 0
    %864 = vmatpush1.bf16.msra.mxu0 0
    %865 = vmatprep.subr.bf16.mxu0 0
    %866 = vmatpush1.bf16.msra.mxu0 %v846
    %867 = vmatprep.subr.bf16.mxu0 0
    %868 = vmatpush2.bf16.msra.mxu0 0
    %869 = vmatprep.subr.bf16.mxu0 0
    %870 = vmatpush2.bf16.msra.mxu0 0
    %871 = vmatprep.subr.bf16.mxu0 0
    %872 = vmatpush2.bf16.msra.mxu0 0
    %873 = vmatprep.subr.bf16.mxu0 0
    %874 = vmatpush2.bf16.msra.mxu0 0
    %875 = vmatprep.subr.bf16.mxu0 0
    %876 = vmatpush2.bf16.msra.mxu0 0
    %877 = vmatprep.subr.bf16.mxu0 0
    %878 = vmatpush2.bf16.msra.mxu0 0
    %879 = vmatprep.subr.bf16.mxu0 0
    %880 = vmatpush2.bf16.msra.mxu0 0
    %881 = vmatprep.subr.bf16.mxu0 0
    %882 = vmatpush2.bf16.msra.mxu0 0
    %883 = vmatprep.mubr.bf16.mxu0 0
    %884 = vmatmul.mubr.bf16.gmra.mxu0 %v849
    %v885 = vpop.f32.mrf.mxu0
    %v886 = vadd.f32 0.0, %v885
    %v887 = vpop.f32.mrf.mxu0
    %v888 = vpop.f32.mrf.mxu0
    %v889 = vadd.f32 0.0, %v888
    %v890 = vpop.f32.mrf.mxu0
    %891 = vdwg.mxu0
    %vm892 = vcmp.gt.f32.partialorder %v886, 0.0
    %vm893 = vcmp.gt.f32.partialorder %v889, 0.0
    %v894 = vmin.f32 %v886, 0.0
    %v895 = vmin.f32 %v889, 0.0
    %v896 = vmul.f32 %v894, 1.442695
    %v897 = vpow.pop %v896
    %v898 = vmul.f32 %v895, 1.442695
    %v899 = vpow.pop %v898
    %v900 = vsub.f32 %v897, 1.0
    %v901 = vsub.f32 %v899, 1.0
    %v902 = vsel %vm892, %v886, %v900
    %v903 = vsel %vm893, %v889, %v901
    %906 = vrot.lane.b32.xlu0 %v902, 32
    %v907 = vpop.permute.xlu0 %906
    %908 = vrot.lane.b32.xlu0 %v903, 32
    %v909 = vpop.permute.xlu0 %908
    %v912 = vsel %vm491, %v759, %v907
    %v913 = vsel %vm491, %v760, %v909
    %vm914 = vcmp.gt.f32.partialorder %v912, 0.0
    %vm915 = vcmp.gt.f32.partialorder %v913, 0.0
    %v916 = vmin.f32 %v912, 0.0
    %v917 = vmin.f32 %v913, 0.0
    %v918 = vmul.f32 %v916, 1.442695
    %v919 = vpow.pop %v918
    %v920 = vmul.f32 %v917, 1.442695
    %v921 = vpow.pop %v920
    %v922 = vsub.f32 %v919, 1.0
    %v923 = vsub.f32 %v921, 1.0
    %v924 = vsel %vm914, %v912, %v922
    %v925 = vsel %vm915, %v913, %v923
    %926 = vst.msk [vmem:[#allocation2] sm:$0xff] %vm154, %v924
    %927 = vst.msk [vmem:[#allocation2 + $0x8] sm:$0xff] %vm154, %v925
    // Predicated region
    $region33: #{tpu_custom_call.1} parent=1 // pred_check
      _
    $region34: #{tpu_custom_call.1} parent=1 // pred_check_branch
      %929 = sbr.rel (0) target = $region36
    $region35: #{tpu_custom_call.1} parent=1 // pred_region
      %s931 = ssub.s32 256, 256
      %932 = vsyncadd [#allocation3], %s931
      %s933 = sshll.u32 [#allocation2], 4
      %s934 = int_to_ptr.vmem [resolvable:$true] %s933
      %939 = dma.vmem_to_hbm [thread:$0]  %s934, 256, %s6, [#allocation3], 128, 128, 8
    $region36: #{tpu_custom_call.1} parent=1 // pred_fallthru
      _
    // Predicated region
    $region37: #{tpu_custom_call.1} parent=1 // pred_check
      _
    $region38: #{tpu_custom_call.1} parent=1 // pred_check_branch
      %941 = sbr.rel (0) target = $region40
    $region39: #{tpu_custom_call.1} parent=1 // pred_region
      %942 = dma.done [#allocation3], 256
    $region40: #{tpu_custom_call.1} parent=1 // pred_fallthru
      _
    %943 = vsyncpa [#allocation3], 1

</llo_original>
